<compile_context>
chip_gen: v6e
topology: v6e:2x2x1
jax: 0.10.0
libtpu: 0.0.40
codegen_flags: <defaults>
</compile_context>

<pallas_src>
import functools
from typing import NamedTuple

import numpy as np
import jax
import jax.numpy as jnp
from jax.experimental import pallas as pl
from jax.experimental.pallas import tpu as pltpu


def _round_up(x, m):
    return ((x + m - 1) // m) * m


class Meta(NamedTuple):
    n: int
    cin: int
    h: int
    w: int
    cout: int
    num_classes: int
    pool_k: int
    m_pad: int   # padded im2col rows (contraction dim of the pool matmul)
    k_pad: int   # padded im2col cols (contraction dim of the conv matmul)


# ----------------------------------------------------------------------------
# The single fused kernel:
#   conv (im2col matmul) + bias + ReLU  ->  avg-pool matmul  ->  classifier.
# Everything stays in VMEM / vregs for the whole kernel (single grid step).
# ----------------------------------------------------------------------------
def _fused_kernel(patches_ref, wconv_ref, bconv_ref, pool_ref, wfc_ref,
                  bfc_ref, pooled_ref, fc_ref):
    # Stage 1: features + ReLU.  bf16 operands, f32 accumulation on the MXU.
    feat = jnp.dot(patches_ref[...], wconv_ref[...],
                   preferred_element_type=jnp.float32)
    feat = jnp.maximum(feat + bconv_ref[...], 0.0)            # (Mp, Cpad) f32
    # NOTE: padded rows (m >= N*H*W) hold relu(bias) != 0; the pool matrix has
    # all-zero columns at those positions, so they never reach the outputs.

    # Stage 2: avg_pool2d(k=7, stride=1) as ONE f32 matmul over the whole
    # feature slab.  The exact 1/k^2 weight is baked into the f32 pool matrix.
    pooled = jnp.dot(pool_ref[...], feat,
                     preferred_element_type=jnp.float32)      # (OHW*nb, Cpad)
    pooled_ref[...] = pooled

    # Stage 3: classifier.  Rows of `pooled` are ordered o*nb + n; contract
    # over (spatial o, channel c) with a static loop over the (tiny) OHW
    # spatial positions (OHW == 1 for real DenseNet 7x7 feature maps).
    ohw = wfc_ref.shape[0]
    nb = fc_ref.shape[0]
    fc = bfc_ref[...]                                          # (1, NCp) broadcasts
    for o in range(ohw):
        fc = fc + jnp.dot(pooled[o * nb:(o + 1) * nb, :], wfc_ref[o],
                          preferred_element_type=jnp.float32)
    fc_ref[...] = fc


def _fused_forward_call(patches_p, prepped):
    m_pad, k_pad = patches_p.shape
    cpad = prepped["wconv"].shape[1]
    ohw, _, ncp = prepped["wfc"].shape
    rp = prepped["pool"].shape[0]
    nb = rp // ohw

    return pl.pallas_call(
        _fused_kernel,
        out_shape=(jax.ShapeDtypeStruct((rp, cpad), jnp.float32),
                   jax.ShapeDtypeStruct((nb, ncp), jnp.float32)),
        grid=(1,),
        in_specs=[
            pl.BlockSpec((m_pad, k_pad), lambda i: (0, 0)),       # im2col patches
            pl.BlockSpec((k_pad, cpad), lambda i: (0, 0)),        # conv weight
            pl.BlockSpec((1, cpad), lambda i: (0, 0)),            # conv bias
            pl.BlockSpec((rp, m_pad), lambda i: (0, 0)),          # pool matrix
            pl.BlockSpec((ohw, cpad, ncp), lambda i: (0, 0, 0)),  # fc weight
            pl.BlockSpec((1, ncp), lambda i: (0, 0)),             # fc bias
        ],
        out_specs=(pl.BlockSpec((rp, cpad), lambda i: (0, 0)),
                   pl.BlockSpec((nb, ncp), lambda i: (0, 0))),
        compiler_params=pltpu.CompilerParams(
            dimension_semantics=("arbitrary",)),
    )(patches_p, prepped["wconv"], prepped["bconv"], prepped["pool"],
      prepped["wfc"], prepped["bfc"])


# ----------------------------------------------------------------------------
# One-time (host / numpy) weight preparation: padding, pool matrix, classifier
# weight rearrangement.  None of this runs in the per-forward hot path.
# ----------------------------------------------------------------------------
def prepare_model(params, input_shape, pool_k=7):
    N, Cin, H, W = input_shape
    conv_w = np.asarray(params["conv_w"], np.float32)
    conv_b = np.asarray(params["conv_b"], np.float32)
    cls_w = np.asarray(params["cls_w"], np.float32)
    cls_b = np.asarray(params["cls_b"], np.float32)
    Cout = conv_w.shape[0]
    num_classes = cls_w.shape[0]
    OH, OW = H - pool_k + 1, W - pool_k + 1
    OHW, HW = OH * OW, H * W

    k_pad = _round_up(Cin * 9, 128)       # conv contraction, lane-aligned
    cpad = _round_up(Cout, 128)           # feature channels, lane-aligned
    ncp = _round_up(num_classes, 128)     # logits, lane-aligned
    m_pad = _round_up(N * HW, 128)        # im2col rows / pool contraction
    nb = _round_up(N, 8)                  # batch rows per spatial position
    rp = OHW * nb                         # pooled rows (multiple of 8)

    # Conv weight (Cout, Cin, 3, 3) -> (Cin*9, Cout), zero-padded.
    wconv = np.zeros((k_pad, cpad), np.float32)
    wconv[:Cin * 9, :Cout] = conv_w.reshape(Cout, Cin * 9).T
    bconv = np.zeros((1, cpad), np.float32)
    bconv[0, :Cout] = conv_b

    # Pool matrix P[o*nb + n, n*HW + p] = 1/k^2 for p in window(o), else 0.
    # Kept in f32 so 1/49 is exact to f32 precision; zero columns cover both
    # the padded im2col rows and the cross-batch positions.
    pool = np.zeros((rp, m_pad), np.float32)
    inv = 1.0 / float(pool_k * pool_k)
    for oh in range(OH):
        for ow in range(OW):
            o = oh * OW + ow
            for n in range(N):
                row = o * nb + n
                for kh in range(pool_k):
                    for kw in range(pool_k):
                        p = (oh + kh) * W + (ow + kw)
                        pool[row, n * HW + p] = inv

    # Classifier weight rearranged to the pooled (o, c) order so the kernel
    # needs no activation transpose: W2[o, c, j] = cls_w[j, c*OHW + o].
    w2 = cls_w.reshape(num_classes, Cout, OHW).transpose(2, 1, 0)
    wfc = np.zeros((OHW, cpad, ncp), np.float32)
    wfc[:, :Cout, :num_classes] = w2
    bfc = np.zeros((1, ncp), np.float32)
    bfc[0, :num_classes] = cls_b

    prepped = {
        "wconv": jnp.asarray(wconv, jnp.bfloat16),
        "bconv": jnp.asarray(bconv),
        "pool": jnp.asarray(pool),
        "wfc": jnp.asarray(wfc),
        "bfc": jnp.asarray(bfc),
    }
    meta = Meta(n=N, cin=Cin, h=H, w=W, cout=Cout, num_classes=num_classes,
                pool_k=pool_k, m_pad=m_pad, k_pad=k_pad)
    return prepped, meta


def conv3x3_im2col(x_nchw):
    """im2col patches, rows ordered m = n*H*W + (h*W + w), cols cin*9 + kh*3+kw."""
    N, Cin, H, W = x_nchw.shape
    xp = jnp.pad(x_nchw, ((0, 0), (0, 0), (1, 1), (1, 1)))
    cols = jnp.stack(
        [xp[:, :, kh:kh + H, kw:kw + W] for kh in range(3) for kw in range(3)],
        axis=-1)                                         # (N, Cin, H, W, 9)
    return cols.transpose(0, 2, 3, 1, 4).reshape(N * H * W, Cin * 9)


# ----------------------------------------------------------------------------
# Full forward (mirrors DensenetFeatureExtractor.forward)
# ----------------------------------------------------------------------------
@functools.partial(jax.jit, static_argnames=("meta", "extracted_layers"))
def densenet_feature_extractor_forward(x, prepped, *, meta, extracted_layers):
    N, Cin, H, W = meta.n, meta.cin, meta.h, meta.w
    K = meta.pool_k
    OH, OW = H - K + 1, W - K + 1
    OHW = OH * OW
    Cout, ncls = meta.cout, meta.num_classes
    nb = prepped["pool"].shape[0] // OHW

    # im2col + activation pad: the only per-call padding left in the hot path.
    patches = conv3x3_im2col(x.astype(jnp.bfloat16))           # (N*H*W, Cin*9)
    patches_p = jnp.pad(
        patches,
        ((0, meta.m_pad - N * H * W), (0, meta.k_pad - Cin * 9)))

    pooled_p, fc_p = _fused_forward_call(patches_p, prepped)

    # PyTorch .view(N, -1) flattens channel-major (C, OH, OW).
    pooled = pooled_p.reshape(OHW, nb, -1)[:, :N, :Cout]       # (OHW, N, Cout)
    avgpool_flat = jnp.transpose(pooled, (1, 2, 0)).reshape(N, Cout * OHW)

    outputs = []
    if "avgpool" in extracted_layers:
        outputs.append(avgpool_flat)
    if "fc" in extracted_layers:
        outputs.append(fc_p[:N, :ncls])
    return outputs


# ----------------------------------------------------------------------------
# Pure-JAX reference (f32) for correctness check
# ----------------------------------------------------------------------------
def reference_forward(x, params, extracted_layers, pool_k=7):
    conv_w, conv_b = params["conv_w"], params["conv_b"]
    cls_w, cls_b = params["cls_w"], params["cls_b"]
    feat = jax.lax.conv_general_dilated(
        x, conv_w, window_strides=(1, 1), padding=((1, 1), (1, 1)),
        dimension_numbers=("NCHW", "OIHW", "NCHW"),
    ) + conv_b[None, :, None, None]
    out = jnp.maximum(feat, 0.0)
    pooled = jax.lax.reduce_window(
        out, 0.0, jax.lax.add, (1, 1, pool_k, pool_k), (1, 1, 1, 1),
        "VALID") / float(pool_k * pool_k)
    flat = pooled.reshape(x.shape[0], -1)
    outputs = []
    if "avgpool" in extracted_layers:
        outputs.append(flat)
    if "fc" in extracted_layers:
        outputs.append(flat @ cls_w.T + cls_b)
    return outputs


# ----------------------------------------------------------------------------
if __name__ == "__main__":
    key = jax.random.PRNGKey(0)
    k_x, k_cw, k_cb, k_ww, k_wb = jax.random.split(key, 5)

    # DenseNet-consistent small shapes: `features` ends at 7x7 spatial, so the
    # 7x7 / stride-1 avg pool produces a 1x1 map per channel.
    N, Cin, H, W = 2, 4, 7, 7
    Cout = 32
    num_classes = 10
    extracted_layers = ("avgpool", "fc")

    x = jax.random.normal(k_x, (N, Cin, H, W), dtype=jnp.float32)
    params = {
        "conv_w": 0.1 * jax.random.normal(k_cw, (Cout, Cin, 3, 3), jnp.float32),
        "conv_b": 0.1 * jax.random.normal(k_cb, (Cout,), jnp.float32),
        "cls_w": 0.1 * jax.random.normal(k_ww, (num_classes, Cout), jnp.float32),
        "cls_b": 0.1 * jax.random.normal(k_wb, (num_classes,), jnp.float32),
    }

    prepped, meta = prepare_model(params, (N, Cin, H, W))

    outs = densenet_feature_extractor_forward(
        x, prepped, meta=meta, extracted_layers=extracted_layers)
    outs = [jax.block_until_ready(o) for o in outs]

    refs = reference_forward(x, params, extracted_layers)
    for o, r in zip(outs, refs):
        assert o.shape == r.shape, (o.shape, r.shape)
        err = float(jnp.max(jnp.abs(o.astype(jnp.float32) - r)))
        # Conv stage uses bf16 operands (f32 accumulation); pool + FC are f32.
        assert err < 2e-2, err

    print("KERNEL_OK")
</pallas_src>

<mosaic_0001>
module attributes {stable_mosaic.version = 11 : i64} {
  func.func @_fused_kernel(%arg0: i32, %arg1: memref<128x128xbf16, #tpu.memory_space<vmem>>, %arg2: memref<128x128xbf16, #tpu.memory_space<vmem>>, %arg3: memref<1x128xf32, #tpu.memory_space<vmem>>, %arg4: memref<8x128xf32, #tpu.memory_space<vmem>>, %arg5: memref<1x128x128xf32, #tpu.memory_space<vmem>>, %arg6: memref<1x128xf32, #tpu.memory_space<vmem>>, %arg7: memref<8x128xf32, #tpu.memory_space<vmem>>, %arg8: memref<8x128xf32, #tpu.memory_space<vmem>>) attributes {dimension_semantics = [#tpu.dimension_semantics<arbitrary>], iteration_bounds = array<i64: 1>, scalar_prefetch = 0 : i64, scratch_operands = 0 : i64, tpu.core_type = #tpu.core_type<tc>, window_params = [{pipeline_mode = #tpu.pipeline_mode<synchronous>, transform_indices = @transform_0, window_bounds = array<i64: 128, 128>}, {pipeline_mode = #tpu.pipeline_mode<synchronous>, transform_indices = @transform_1, window_bounds = array<i64: 128, 128>}, {pipeline_mode = #tpu.pipeline_mode<synchronous>, transform_indices = @transform_2, window_bounds = array<i64: 1, 128>}, {pipeline_mode = #tpu.pipeline_mode<synchronous>, transform_indices = @transform_3, window_bounds = array<i64: 8, 128>}, {pipeline_mode = #tpu.pipeline_mode<synchronous>, transform_indices = @transform_4, window_bounds = array<i64: 1, 128, 128>}, {pipeline_mode = #tpu.pipeline_mode<synchronous>, transform_indices = @transform_5, window_bounds = array<i64: 1, 128>}, {pipeline_mode = #tpu.pipeline_mode<synchronous>, transform_indices = @transform_6, window_bounds = array<i64: 8, 128>}, {pipeline_mode = #tpu.pipeline_mode<synchronous>, transform_indices = @transform_7, window_bounds = array<i64: 8, 128>}]} {
    %c0 = arith.constant 0 : index
    %c0_0 = arith.constant 0 : index
    %0 = vector.load %arg1[%c0, %c0_0] : memref<128x128xbf16, #tpu.memory_space<vmem>>, vector<128x128xbf16>
    %c0_1 = arith.constant 0 : index
    %c0_2 = arith.constant 0 : index
    %1 = vector.load %arg2[%c0_1, %c0_2] : memref<128x128xbf16, #tpu.memory_space<vmem>>, vector<128x128xbf16>
    %cst = arith.constant dense<0.000000e+00> : vector<128x128xf32>
    %2 = tpu.matmul %0, %1, %cst {dimension_numbers = #tpu.dot_dimension_numbers<[1], [0], [0], [1], [0, 0, 1, 1], [], []>} : vector<128x128xbf16>, vector<128x128xbf16>, vector<128x128xf32> -> vector<128x128xf32>
    %c0_3 = arith.constant 0 : index
    %c0_4 = arith.constant 0 : index
    %3 = vector.load %arg3[%c0_3, %c0_4] : memref<1x128xf32, #tpu.memory_space<vmem>>, vector<1x128xf32>
    %4 = vector.broadcast %3 : vector<1x128xf32> to vector<128x128xf32>
    %5 = arith.addf %2, %4 : vector<128x128xf32>
    %cst_5 = arith.constant 0.000000e+00 : f32
    %6 = vector.broadcast %cst_5 : f32 to vector<128x128xf32>
    %7 = arith.maximumf %5, %6 : vector<128x128xf32>
    %c0_6 = arith.constant 0 : index
    %c0_7 = arith.constant 0 : index
    %8 = vector.load %arg4[%c0_6, %c0_7] : memref<8x128xf32, #tpu.memory_space<vmem>>, vector<8x128xf32>
    %cst_8 = arith.constant dense<0.000000e+00> : vector<8x128xf32>
    %9 = tpu.matmul %8, %7, %cst_8 {dimension_numbers = #tpu.dot_dimension_numbers<[1], [0], [0], [1], [0, 0, 1, 1], [], []>} : vector<8x128xf32>, vector<128x128xf32>, vector<8x128xf32> -> vector<8x128xf32>
    %c0_9 = arith.constant 0 : index
    %c0_10 = arith.constant 0 : index
    %10 = vector.load %arg7[%c0_9, %c0_10] : memref<8x128xf32, #tpu.memory_space<vmem>>, vector<8x128xf32>
    tpu.vector_store %arg7[%c0_9, %c0_10], %9 {strides = array<i32>} : memref<8x128xf32, #tpu.memory_space<vmem>>, vector<8x128xf32>,
    %c0_11 = arith.constant 0 : index
    %c0_12 = arith.constant 0 : index
    %11 = vector.load %arg6[%c0_11, %c0_12] : memref<1x128xf32, #tpu.memory_space<vmem>>, vector<1x128xf32>
    %c0_13 = arith.constant 0 : index
    %c0_14 = arith.constant 0 : index
    %c0_15 = arith.constant 0 : index
    %12 = vector.load %arg5[%c0_13, %c0_14, %c0_15] : memref<1x128x128xf32, #tpu.memory_space<vmem>>, vector<1x128x128xf32>
    %13 = vector.shape_cast %12 : vector<1x128x128xf32> to vector<128x128xf32>
    %cst_16 = arith.constant dense<0.000000e+00> : vector<8x128xf32>
    %14 = tpu.matmul %9, %13, %cst_16 {dimension_numbers = #tpu.dot_dimension_numbers<[1], [0], [0], [1], [0, 0, 1, 1], [], []>} : vector<8x128xf32>, vector<128x128xf32>, vector<8x128xf32> -> vector<8x128xf32>
    %15 = vector.broadcast %11 : vector<1x128xf32> to vector<8x128xf32>
    %16 = arith.addf %15, %14 : vector<8x128xf32>
    %c0_17 = arith.constant 0 : index
    %c0_18 = arith.constant 0 : index
    %17 = vector.load %arg8[%c0_17, %c0_18] : memref<8x128xf32, #tpu.memory_space<vmem>>, vector<8x128xf32>
    tpu.vector_store %arg8[%c0_17, %c0_18], %16 {strides = array<i32>} : memref<8x128xf32, #tpu.memory_space<vmem>>, vector<8x128xf32>,
    return
  }
  func.func @transform_0(%arg0: i32) -> (i32, i32) {
    %c0_i32 = arith.constant 0 : i32
    %c0_i32_0 = arith.constant 0 : i32
    %c0_i32_1 = arith.constant 0 : i32
    return %c0_i32, %c0_i32_0 : i32, i32
  }
  func.func @transform_1(%arg0: i32) -> (i32, i32) {
    %c0_i32 = arith.constant 0 : i32
    %c0_i32_0 = arith.constant 0 : i32
    %c0_i32_1 = arith.constant 0 : i32
    return %c0_i32, %c0_i32_0 : i32, i32
  }
  func.func @transform_2(%arg0: i32) -> (i32, i32) {
    %c0_i32 = arith.constant 0 : i32
    %c0_i32_0 = arith.constant 0 : i32
    %c0_i32_1 = arith.constant 0 : i32
    return %c0_i32, %c0_i32_0 : i32, i32
  }
  func.func @transform_3(%arg0: i32) -> (i32, i32) {
    %c0_i32 = arith.constant 0 : i32
    %c0_i32_0 = arith.constant 0 : i32
    %c0_i32_1 = arith.constant 0 : i32
    return %c0_i32, %c0_i32_0 : i32, i32
  }
  func.func @transform_4(%arg0: i32) -> (i32, i32, i32) {
    %c0_i32 = arith.constant 0 : i32
    %c0_i32_0 = arith.constant 0 : i32
    %c0_i32_1 = arith.constant 0 : i32
    %c0_i32_2 = arith.constant 0 : i32
    return %c0_i32, %c0_i32_0, %c0_i32_1 : i32, i32, i32
  }
  func.func @transform_5(%arg0: i32) -> (i32, i32) {
    %c0_i32 = arith.constant 0 : i32
    %c0_i32_0 = arith.constant 0 : i32
    %c0_i32_1 = arith.constant 0 : i32
    return %c0_i32, %c0_i32_0 : i32, i32
  }
  func.func @transform_6(%arg0: i32) -> (i32, i32) {
    %c0_i32 = arith.constant 0 : i32
    %c0_i32_0 = arith.constant 0 : i32
    %c0_i32_1 = arith.constant 0 : i32
    return %c0_i32, %c0_i32_0 : i32, i32
  }
  func.func @transform_7(%arg0: i32) -> (i32, i32) {
    %c0_i32 = arith.constant 0 : i32
    %c0_i32_0 = arith.constant 0 : i32
    %c0_i32_1 = arith.constant 0 : i32
    return %c0_i32, %c0_i32_0 : i32, i32
  }
}

</mosaic_0001>

<llo_original>
// kernel: densenet_feature_extractor_forward.1
$region0: #{densenet_feature_extractor_forward.1}
  #allocation0 [shape = 'u32[]', space=smem, size = 0x4, offset = 0x4, fixed_abs, tag = 'smem constant byte address 0x4 - core index']
  #allocation1 [shape = 'u32[144,128]{1,0:T(1,128)}', space=vmem, size = 0x12000, scoped, tag = 'internal scratch']
  %s0 = inlined_call_operand.vmem [shape: bf16[128,128], index: 0, kind: input, shape index: {}]
  %s1 = inlined_call_operand.vmem [shape: bf16[128,128], index: 1, kind: input, shape index: {}]
  %s2 = inlined_call_operand.vmem [shape: f32[1,128], index: 2, kind: input, shape index: {}]
  %s3 = inlined_call_operand.vmem [shape: f32[8,128], index: 3, kind: input, shape index: {}]
  %s4 = inlined_call_operand.vmem [shape: f32[1,128,128], index: 4, kind: input, shape index: {}]
  %s5 = inlined_call_operand.vmem [shape: f32[1,128], index: 5, kind: input, shape index: {}]
  %s6 = inlined_call_operand.vmem [shape: f32[8,128], index: 6, kind: output, shape index: {0}]
  %s7 = inlined_call_operand.vmem [shape: f32[8,128], index: 7, kind: output, shape index: {1}]
  %8 = xla_tuple %s6, %s7
  %s9 = sld [smem:[#allocation0]]
  $region42: #{densenet_feature_extractor_forward.1} parent=0
    _
  %s11 = ssub.s32 1, %s9
  %s12 = scalar_select 0, %s11, %s9
  // Predicated region
  $region2: #{densenet_feature_extractor_forward.1} parent=0 // pred_check
    _
  $region3: #{densenet_feature_extractor_forward.1} parent=0 // pred_check_branch
    %14 = sbr.rel (0) target = $region5
  $region4: #{densenet_feature_extractor_forward.1} parent=0 // pred_region
    _
  $region5: #{densenet_feature_extractor_forward.1} parent=0 // pred_fallthru
    _
  // Predicated region
  $region6: #{densenet_feature_extractor_forward.1} parent=0 // pred_check
    _
  $region7: #{densenet_feature_extractor_forward.1} parent=0 // pred_check_branch
    %16 = sbr.rel (0) target = $region9
  $region8: #{densenet_feature_extractor_forward.1} parent=0 // pred_region
    _
  $region9: #{densenet_feature_extractor_forward.1} parent=0 // pred_fallthru
    _
  // Predicated region
  $region10: #{densenet_feature_extractor_forward.1} parent=0 // pred_check
    _
  $region11: #{densenet_feature_extractor_forward.1} parent=0 // pred_check_branch
    %18 = sbr.rel (0) target = $region13
  $region12: #{densenet_feature_extractor_forward.1} parent=0 // pred_region
    _
  $region13: #{densenet_feature_extractor_forward.1} parent=0 // pred_fallthru
    _
  // Predicated region
  $region14: #{densenet_feature_extractor_forward.1} parent=0 // pred_check
    _
  $region15: #{densenet_feature_extractor_forward.1} parent=0 // pred_check_branch
    %20 = sbr.rel (0) target = $region17
  $region16: #{densenet_feature_extractor_forward.1} parent=0 // pred_region
    _
  $region17: #{densenet_feature_extractor_forward.1} parent=0 // pred_fallthru
    _
  // Predicated region
  $region18: #{densenet_feature_extractor_forward.1} parent=0 // pred_check
    _
  $region19: #{densenet_feature_extractor_forward.1} parent=0 // pred_check_branch
    %22 = sbr.rel (0) target = $region21
  $region20: #{densenet_feature_extractor_forward.1} parent=0 // pred_region
    _
  $region21: #{densenet_feature_extractor_forward.1} parent=0 // pred_fallthru
    _
  // Predicated region
  $region22: #{densenet_feature_extractor_forward.1} parent=0 // pred_check
    _
  $region23: #{densenet_feature_extractor_forward.1} parent=0 // pred_check_branch
    %24 = sbr.rel (0) target = $region25
  $region24: #{densenet_feature_extractor_forward.1} parent=0 // pred_region
    _
  $region25: #{densenet_feature_extractor_forward.1} parent=0 // pred_fallthru
    _
  %v26 = vld [vmem:[%s0] sm:$0xf]
  %v27 = vld [vmem:[%s0 + $0x4] sm:$0xf]
  %v28 = vld [vmem:[%s0 + $0x8] sm:$0xf]
  %v29 = vld [vmem:[%s0 + $0xc] sm:$0xf]
  %v30 = vld [vmem:[%s0 + $0x10] sm:$0xf]
  %v31 = vld [vmem:[%s0 + $0x14] sm:$0xf]
  %v32 = vld [vmem:[%s0 + $0x18] sm:$0xf]
  %v33 = vld [vmem:[%s0 + $0x1c] sm:$0xf]
  %v34 = vld [vmem:[%s0 + $0x20] sm:$0xf]
  %v35 = vld [vmem:[%s0 + $0x24] sm:$0xf]
  %v36 = vld [vmem:[%s0 + $0x28] sm:$0xf]
  %v37 = vld [vmem:[%s0 + $0x2c] sm:$0xf]
  %v38 = vld [vmem:[%s0 + $0x30] sm:$0xf]
  %v39 = vld [vmem:[%s0 + $0x34] sm:$0xf]
  %v40 = vld [vmem:[%s0 + $0x38] sm:$0xf]
  %v41 = vld [vmem:[%s0 + $0x3c] sm:$0xf]
  %v42 = vld [vmem:[%s1] sm:$0xf]
  %v43 = vld [vmem:[%s1 + $0x4] sm:$0xf]
  %v44 = vld [vmem:[%s1 + $0x8] sm:$0xf]
  %v45 = vld [vmem:[%s1 + $0xc] sm:$0xf]
  %v46 = vld [vmem:[%s1 + $0x10] sm:$0xf]
  %v47 = vld [vmem:[%s1 + $0x14] sm:$0xf]
  %v48 = vld [vmem:[%s1 + $0x18] sm:$0xf]
  %v49 = vld [vmem:[%s1 + $0x1c] sm:$0xf]
  %v50 = vld [vmem:[%s1 + $0x20] sm:$0xf]
  %v51 = vld [vmem:[%s1 + $0x24] sm:$0xf]
  %v52 = vld [vmem:[%s1 + $0x28] sm:$0xf]
  %v53 = vld [vmem:[%s1 + $0x2c] sm:$0xf]
  %v54 = vld [vmem:[%s1 + $0x30] sm:$0xf]
  %v55 = vld [vmem:[%s1 + $0x34] sm:$0xf]
  %v56 = vld [vmem:[%s1 + $0x38] sm:$0xf]
  %v57 = vld [vmem:[%s1 + $0x3c] sm:$0xf]
  %v58 = vld [vmem:[%s2] sm:$0x1]
  %v60 = vlaneseq
  %v61 = vshrl.u32 %v60, 7
  %v62 = vsub.s32 0, %v61
  %v63 = vrot.slane %v58, %v62
  %v81 = vunpack.c.l.b16 %v26
  %v82 = vunpack.c.l.b16 %v27
  %v83 = vunpack.c.l.b16 %v28
  %v84 = vunpack.c.l.b16 %v29
  %v85 = vunpack.c.l.b16 %v30
  %v86 = vunpack.c.l.b16 %v31
  %v87 = vunpack.c.l.b16 %v32
  %v88 = vunpack.c.l.b16 %v33
  %v89 = vunpack.c.l.b16 %v34
  %v90 = vunpack.c.l.b16 %v35
  %v91 = vunpack.c.l.b16 %v36
  %v92 = vunpack.c.l.b16 %v37
  %v93 = vunpack.c.l.b16 %v38
  %v94 = vunpack.c.l.b16 %v39
  %v95 = vunpack.c.l.b16 %v40
  %v96 = vunpack.c.l.b16 %v41
  %v97 = vpack.c.b16 %v82, %v81
  %v98 = vpack.c.b16 %v84, %v83
  %v99 = vpack.c.b16 %v86, %v85
  %v100 = vpack.c.b16 %v88, %v87
  %v101 = vpack.c.b16 %v90, %v89
  %v102 = vpack.c.b16 %v92, %v91
  %v103 = vpack.c.b16 %v94, %v93
  %v104 = vpack.c.b16 %v96, %v95
  %v129 = vunpack.c.l.b16 %v42
  %v130 = vunpack.c.l.b16 %v43
  %v131 = vunpack.c.l.b16 %v44
  %v132 = vunpack.c.l.b16 %v45
  %v133 = vunpack.c.l.b16 %v46
  %v134 = vunpack.c.l.b16 %v47
  %v135 = vunpack.c.l.b16 %v48
  %v136 = vunpack.c.l.b16 %v49
  %v137 = vunpack.c.l.b16 %v50
  %v138 = vunpack.c.l.b16 %v51
  %v139 = vunpack.c.l.b16 %v52
  %v140 = vunpack.c.l.b16 %v53
  %v141 = vunpack.c.l.b16 %v54
  %v142 = vunpack.c.l.b16 %v55
  %v143 = vunpack.c.l.b16 %v56
  %v144 = vunpack.c.l.b16 %v57
  %v145 = vpack.c.b16 %v130, %v129
  %v146 = vpack.c.b16 %v132, %v131
  %v147 = vpack.c.b16 %v134, %v133
  %v148 = vpack.c.b16 %v136, %v135
  %v149 = vpack.c.b16 %v138, %v137
  %v150 = vpack.c.b16 %v140, %v139
  %v151 = vpack.c.b16 %v142, %v141
  %v152 = vpack.c.b16 %v144, %v143
  %161 = vmatprep.subr.bf16.mxu0 0
  %162 = vmatpush1.bf16.msra.mxu0 %v152
  %163 = vmatprep.subr.bf16.mxu0 0
  %164 = vmatpush1.bf16.msra.mxu0 %v151
  %165 = vmatprep.subr.bf16.mxu0 0
  %166 = vmatpush1.bf16.msra.mxu0 %v150
  %167 = vmatprep.subr.bf16.mxu0 0
  %168 = vmatpush1.bf16.msra.mxu0 %v149
  %169 = vmatprep.subr.bf16.mxu0 0
  %170 = vmatpush1.bf16.msra.mxu0 %v148
  %171 = vmatprep.subr.bf16.mxu0 0
  %172 = vmatpush1.bf16.msra.mxu0 %v147
  %173 = vmatprep.subr.bf16.mxu0 0
  %174 = vmatpush1.bf16.msra.mxu0 %v146
  %175 = vmatprep.subr.bf16.mxu0 0
  %176 = vmatpush1.bf16.msra.mxu0 %v145
  %177 = vmatprep.subr.bf16.mxu0 0
  %178 = vmatpush2.bf16.msra.mxu0 0
  %179 = vmatprep.subr.bf16.mxu0 0
  %180 = vmatpush2.bf16.msra.mxu0 0
  %181 = vmatprep.subr.bf16.mxu0 0
  %182 = vmatpush2.bf16.msra.mxu0 0
  %183 = vmatprep.subr.bf16.mxu0 0
  %184 = vmatpush2.bf16.msra.mxu0 0
  %185 = vmatprep.subr.bf16.mxu0 0
  %186 = vmatpush2.bf16.msra.mxu0 0
  %187 = vmatprep.subr.bf16.mxu0 0
  %188 = vmatpush2.bf16.msra.mxu0 0
  %189 = vmatprep.subr.bf16.mxu0 0
  %190 = vmatpush2.bf16.msra.mxu0 0
  %191 = vmatprep.subr.bf16.mxu0 0
  %192 = vmatpush2.bf16.msra.mxu0 0
  %193 = vmatprep.mubr.bf16.mxu0 0
  %194 = vmatmul.mubr.bf16.gmra.mxu0 %v97
  %v195 = vpop.f32.mrf.mxu0
  %v196 = vadd.f32 %v63, %v195
  %v197 = vpop.f32.mrf.mxu0
  %v198 = vpop.f32.mrf.mxu0
  %v199 = vadd.f32 %v63, %v198
  %v200 = vpop.f32.mrf.mxu0
  %201 = vmatprep.mubr.bf16.mxu0 0
  %202 = vmatmul.mubr.bf16.gmra.mxu0 %v98
  %v203 = vpop.f32.mrf.mxu0
  %v204 = vadd.f32 %v63, %v203
  %v205 = vpop.f32.mrf.mxu0
  %v206 = vpop.f32.mrf.mxu0
  %v207 = vadd.f32 %v63, %v206
  %v208 = vpop.f32.mrf.mxu0
  %209 = vmatprep.mubr.bf16.mxu0 0
  %210 = vmatmul.mubr.bf16.gmra.mxu0 %v99
  %v211 = vpop.f32.mrf.mxu0
  %v212 = vadd.f32 %v63, %v211
  %v213 = vpop.f32.mrf.mxu0
  %v214 = vpop.f32.mrf.mxu0
  %v215 = vadd.f32 %v63, %v214
  %v216 = vpop.f32.mrf.mxu0
  %217 = vmatprep.mubr.bf16.mxu0 0
  %218 = vmatmul.mubr.bf16.gmra.mxu0 %v100
  %v219 = vpop.f32.mrf.mxu0
  %v220 = vadd.f32 %v63, %v219
  %v221 = vpop.f32.mrf.mxu0
  %v222 = vpop.f32.mrf.mxu0
  %v223 = vadd.f32 %v63, %v222
  %v224 = vpop.f32.mrf.mxu0
  %225 = vmatprep.mubr.bf16.mxu0 0
  %226 = vmatmul.mubr.bf16.gmra.mxu0 %v101
  %v227 = vpop.f32.mrf.mxu0
  %v228 = vadd.f32 %v63, %v227
  %v229 = vpop.f32.mrf.mxu0
  %v230 = vpop.f32.mrf.mxu0
  %v231 = vadd.f32 %v63, %v230
  %v232 = vpop.f32.mrf.mxu0
  %233 = vmatprep.mubr.bf16.mxu0 0
  %234 = vmatmul.mubr.bf16.gmra.mxu0 %v102
  %v235 = vpop.f32.mrf.mxu0
  %v236 = vadd.f32 %v63, %v235
  %v237 = vpop.f32.mrf.mxu0
  %v238 = vpop.f32.mrf.mxu0
  %v239 = vadd.f32 %v63, %v238
  %v240 = vpop.f32.mrf.mxu0
  %241 = vmatprep.mubr.bf16.mxu0 0
  %242 = vmatmul.mubr.bf16.gmra.mxu0 %v103
  %v243 = vpop.f32.mrf.mxu0
  %v244 = vadd.f32 %v63, %v243
  %v245 = vpop.f32.mrf.mxu0
  %v246 = vpop.f32.mrf.mxu0
  %v247 = vadd.f32 %v63, %v246
  %v248 = vpop.f32.mrf.mxu0
  %249 = vmatprep.mubr.bf16.mxu0 0
  %250 = vmatmul.mubr.bf16.gmra.mxu0 %v104
  %v251 = vpop.f32.mrf.mxu0
  %v252 = vadd.f32 %v63, %v251
  %v253 = vpop.f32.mrf.mxu0
  %v254 = vpop.f32.mrf.mxu0
  %v255 = vadd.f32 %v63, %v254
  %v256 = vpop.f32.mrf.mxu0
  %257 = vdwg.mxu0
  %v258 = vmax.f32 %v196, 0.0
  %v259 = vmax.f32 %v199, 0.0
  %v260 = vmax.f32 %v204, 0.0
  %v261 = vmax.f32 %v207, 0.0
  %v262 = vmax.f32 %v212, 0.0
  %v263 = vmax.f32 %v215, 0.0
  %v264 = vmax.f32 %v220, 0.0
  %v265 = vmax.f32 %v223, 0.0
  %v266 = vmax.f32 %v228, 0.0
  %v267 = vmax.f32 %v231, 0.0
  %v268 = vmax.f32 %v236, 0.0
  %v269 = vmax.f32 %v239, 0.0
  %v270 = vmax.f32 %v244, 0.0
  %v271 = vmax.f32 %v247, 0.0
  %v272 = vmax.f32 %v252, 0.0
  %v273 = vmax.f32 %v255, 0.0
  %v274 = vld [vmem:[%s3] sm:$0xff]
  %275 = vmatprep.subr.mxu0 0.0
  %276 = vmatpush1.msra.mxu0 %v273
  %277 = vmatprep.subr.mxu0 0.0
  %278 = vmatpush1.msra.mxu0 %v272
  %279 = vmatprep.subr.mxu0 0.0
  %280 = vmatpush1.msra.mxu0 %v271
  %281 = vmatprep.subr.mxu0 0.0
  %282 = vmatpush1.msra.mxu0 %v270
  %283 = vmatprep.subr.mxu0 0.0
  %284 = vmatpush1.msra.mxu0 %v269
  %285 = vmatprep.subr.mxu0 0.0
  %286 = vmatpush1.msra.mxu0 %v268
  %287 = vmatprep.subr.mxu0 0.0
  %288 = vmatpush1.msra.mxu0 %v267
  %289 = vmatprep.subr.mxu0 0.0
  %290 = vmatpush1.msra.mxu0 %v266
  %291 = vmatprep.subr.mxu0 0.0
  %292 = vmatpush1.msra.mxu0 %v265
  %293 = vmatprep.subr.mxu0 0.0
  %294 = vmatpush1.msra.mxu0 %v264
  %295 = vmatprep.subr.mxu0 0.0
  %296 = vmatpush1.msra.mxu0 %v263
  %297 = vmatprep.subr.mxu0 0.0
  %298 = vmatpush1.msra.mxu0 %v262
  %299 = vmatprep.subr.mxu0 0.0
  %300 = vmatpush1.msra.mxu0 %v261
  %301 = vmatprep.subr.mxu0 0.0
  %302 = vmatpush1.msra.mxu0 %v260
  %303 = vmatprep.subr.mxu0 0.0
  %304 = vmatpush1.msra.mxu0 %v259
  %305 = vmatprep.subr.mxu0 0.0
  %306 = vmatpush1.msra.mxu0 %v258
  %307 = vmatprep.subr.mxu0 0.0
  %308 = vmatpush2.msra.mxu0 0.0
  %309 = vmatprep.subr.mxu0 0.0
  %310 = vmatpush2.msra.mxu0 0.0
  %311 = vmatprep.subr.mxu0 0.0
  %312 = vmatpush2.msra.mxu0 0.0
  %313 = vmatprep.subr.mxu0 0.0
  %314 = vmatpush2.msra.mxu0 0.0
  %315 = vmatprep.subr.mxu0 0.0
  %316 = vmatpush2.msra.mxu0 0.0
  %317 = vmatprep.subr.mxu0 0.0
  %318 = vmatpush2.msra.mxu0 0.0
  %319 = vmatprep.subr.mxu0 0.0
  %320 = vmatpush2.msra.mxu0 0.0
  %321 = vmatprep.subr.mxu0 0.0
  %322 = vmatpush2.msra.mxu0 0.0
  %323 = vmatprep.subr.mxu0 0.0
  %324 = vmatpush2.msra.mxu0 0.0
  %325 = vmatprep.subr.mxu0 0.0
  %326 = vmatpush2.msra.mxu0 0.0
  %327 = vmatprep.subr.mxu0 0.0
  %328 = vmatpush2.msra.mxu0 0.0
  %329 = vmatprep.subr.mxu0 0.0
  %330 = vmatpush2.msra.mxu0 0.0
  %331 = vmatprep.subr.mxu0 0.0
  %332 = vmatpush2.msra.mxu0 0.0
  %333 = vmatprep.subr.mxu0 0.0
  %334 = vmatpush2.msra.mxu0 0.0
  %335 = vmatprep.subr.mxu0 0.0
  %336 = vmatpush2.msra.mxu0 0.0
  %337 = vmatprep.subr.mxu0 0.0
  %338 = vmatpush2.msra.mxu0 0.0
  %339 = vmatprep.mubr.f32.mxu0 0.0
  %340 = vmatmul.mubr.f32.gmra.mxu0 %v274
  %v341 = vpop.f32.mrf.mxu0
  %v342 = vadd.f32 0.0, %v341
  %v343 = vpop.f32.mrf.mxu0
  %344 = vdwg.mxu0
  %345 = vst [vmem:[%s6] sm:$0xff] %v342
  %v346 = vld [vmem:[%s5] sm:$0x1]
  %v347 = vld [vmem:[%s4] sm:$0xff]
  %v348 = vld [vmem:[%s4 + $0x8] sm:$0xff]
  %v349 = vld [vmem:[%s4 + $0x10] sm:$0xff]
  %v350 = vld [vmem:[%s4 + $0x18] sm:$0xff]
  %v351 = vld [vmem:[%s4 + $0x20] sm:$0xff]
  %v352 = vld [vmem:[%s4 + $0x28] sm:$0xff]
  %v353 = vld [vmem:[%s4 + $0x30] sm:$0xff]
  %v354 = vld [vmem:[%s4 + $0x38] sm:$0xff]
  %v355 = vld [vmem:[%s4 + $0x40] sm:$0xff]
  %v356 = vld [vmem:[%s4 + $0x48] sm:$0xff]
  %v357 = vld [vmem:[%s4 + $0x50] sm:$0xff]
  %v358 = vld [vmem:[%s4 + $0x58] sm:$0xff]
  %v359 = vld [vmem:[%s4 + $0x60] sm:$0xff]
  %v360 = vld [vmem:[%s4 + $0x68] sm:$0xff]
  %v361 = vld [vmem:[%s4 + $0x70] sm:$0xff]
  %v362 = vld [vmem:[%s4 + $0x78] sm:$0xff]
  %363 = vmatprep.subr.mxu0 0.0
  %364 = vmatpush1.msra.mxu0 %v362
  %365 = vmatprep.subr.mxu0 0.0
  %366 = vmatpush1.msra.mxu0 %v361
  %367 = vmatprep.subr.mxu0 0.0
  %368 = vmatpush1.msra.mxu0 %v360
  %369 = vmatprep.subr.mxu0 0.0
  %370 = vmatpush1.msra.mxu0 %v359
  %371 = vmatprep.subr.mxu0 0.0
  %372 = vmatpush1.msra.mxu0 %v358
  %373 = vmatprep.subr.mxu0 0.0
  %374 = vmatpush1.msra.mxu0 %v357
  %375 = vmatprep.subr.mxu0 0.0
  %376 = vmatpush1.msra.mxu0 %v356
  %377 = vmatprep.subr.mxu0 0.0
  %378 = vmatpush1.msra.mxu0 %v355
  %379 = vmatprep.subr.mxu0 0.0
  %380 = vmatpush1.msra.mxu0 %v354
  %381 = vmatprep.subr.mxu0 0.0
  %382 = vmatpush1.msra.mxu0 %v353
  %383 = vmatprep.subr.mxu0 0.0
  %384 = vmatpush1.msra.mxu0 %v352
  %385 = vmatprep.subr.mxu0 0.0
  %386 = vmatpush1.msra.mxu0 %v351
  %387 = vmatprep.subr.mxu0 0.0
  %388 = vmatpush1.msra.mxu0 %v350
  %389 = vmatprep.subr.mxu0 0.0
  %390 = vmatpush1.msra.mxu0 %v349
  %391 = vmatprep.subr.mxu0 0.0
  %392 = vmatpush1.msra.mxu0 %v348
  %393 = vmatprep.subr.mxu0 0.0
  %394 = vmatpush1.msra.mxu0 %v347
  %395 = vmatprep.subr.mxu0 0.0
  %396 = vmatpush2.msra.mxu0 0.0
  %397 = vmatprep.subr.mxu0 0.0
  %398 = vmatpush2.msra.mxu0 0.0
  %399 = vmatprep.subr.mxu0 0.0
  %400 = vmatpush2.msra.mxu0 0.0
  %401 = vmatprep.subr.mxu0 0.0
  %402 = vmatpush2.msra.mxu0 0.0
  %403 = vmatprep.subr.mxu0 0.0
  %404 = vmatpush2.msra.mxu0 0.0
  %405 = vmatprep.subr.mxu0 0.0
  %406 = vmatpush2.msra.mxu0 0.0
  %407 = vmatprep.subr.mxu0 0.0
  %408 = vmatpush2.msra.mxu0 0.0
  %409 = vmatprep.subr.mxu0 0.0
  %410 = vmatpush2.msra.mxu0 0.0
  %411 = vmatprep.subr.mxu0 0.0
  %412 = vmatpush2.msra.mxu0 0.0
  %413 = vmatprep.subr.mxu0 0.0
  %414 = vmatpush2.msra.mxu0 0.0
  %415 = vmatprep.subr.mxu0 0.0
  %416 = vmatpush2.msra.mxu0 0.0
  %417 = vmatprep.subr.mxu0 0.0
  %418 = vmatpush2.msra.mxu0 0.0
  %419 = vmatprep.subr.mxu0 0.0
  %420 = vmatpush2.msra.mxu0 0.0
  %421 = vmatprep.subr.mxu0 0.0
  %422 = vmatpush2.msra.mxu0 0.0
  %423 = vmatprep.subr.mxu0 0.0
  %424 = vmatpush2.msra.mxu0 0.0
  %425 = vmatprep.subr.mxu0 0.0
  %426 = vmatpush2.msra.mxu0 0.0
  %427 = vmatprep.mubr.f32.mxu0 0.0
  %428 = vmatmul.mubr.f32.gmra.mxu0 %v342
  %v429 = vpop.f32.mrf.mxu0
  %v430 = vadd.f32 0.0, %v429
  %v431 = vpop.f32.mrf.mxu0
  %432 = vdwg.mxu0
  %v434 = vlaneseq
  %v435 = vshrl.u32 %v434, 7
  %v436 = vsub.s32 0, %v435
  %v437 = vrot.slane %v346, %v436
  %v439 = vadd.f32 %v437, %v430
  %440 = vst [vmem:[%s7] sm:$0xff] %v439
  // Predicated region
  $region26: #{densenet_feature_extractor_forward.1} parent=0 // pred_check
    _
  $region27: #{densenet_feature_extractor_forward.1} parent=0 // pred_check_branch
    %442 = sbr.rel (0) target = $region29
  $region28: #{densenet_feature_extractor_forward.1} parent=0 // pred_region
    _
  $region29: #{densenet_feature_extractor_forward.1} parent=0 // pred_fallthru
    _
  // Predicated region
  $region30: #{densenet_feature_extractor_forward.1} parent=0 // pred_check
    _
  $region31: #{densenet_feature_extractor_forward.1} parent=0 // pred_check_branch
    %444 = sbr.rel (0) target = $region33
  $region32: #{densenet_feature_extractor_forward.1} parent=0 // pred_region
    _
  $region33: #{densenet_feature_extractor_forward.1} parent=0 // pred_fallthru
    _
  // Predicated region
  $region34: #{densenet_feature_extractor_forward.1} parent=0 // pred_check
    _
  $region35: #{densenet_feature_extractor_forward.1} parent=0 // pred_check_branch
    %446 = sbr.rel (0) target = $region37
  $region36: #{densenet_feature_extractor_forward.1} parent=0 // pred_region
    _
  $region37: #{densenet_feature_extractor_forward.1} parent=0 // pred_fallthru
    _
  // Predicated region
  $region38: #{densenet_feature_extractor_forward.1} parent=0 // pred_check
    _
  $region39: #{densenet_feature_extractor_forward.1} parent=0 // pred_check_branch
    %448 = sbr.rel (0) target = $region41
  $region40: #{densenet_feature_extractor_forward.1} parent=0 // pred_region
    _
  $region41: #{densenet_feature_extractor_forward.1} parent=0 // pred_fallthru
    _

</llo_original>
